<compile_context>
chip_gen: v7x
topology: tpu7x:2x2x1
jax: 0.10.0
libtpu: 0.0.40
codegen_flags: <defaults>
</compile_context>

<pallas_src>
import jax
import jax.numpy as jnp
from jax.experimental import pallas as pl
from jax.experimental.pallas import tpu as pltpu

LANE = 128
SUBLANE = 8


def _vmem_budget_bytes():
    """Generation-aware VMEM budget (v5e/v6e: 128 MiB, v7x: 64 MiB)."""
    try:
        cap = pltpu.get_tpu_info().vmem_capacity_bytes
    except Exception:  # pragma: no cover - conservative fallback
        cap = 64 * 1024 * 1024
    # Leave headroom for double buffering and compiler scratch.
    return max(8 * 1024 * 1024, min(cap // 2, 64 * 1024 * 1024))


def _copy_kernel(x_ref, o_ref):
    o_ref[...] = x_ref[...]


def _tiled_copy_2d(x2d):
    """Tiled VMEM copy of a 2-D array; N should be lane-dense when possible."""
    M, N = x2d.shape
    budget = _vmem_budget_bytes()
    itemsize = jnp.dtype(x2d.dtype).itemsize
    # in-tile + out-tile, double buffered = 4 live tiles per grid step.
    cap_rows = max(SUBLANE, budget // max(1, 4 * N * itemsize))
    cap_rows -= cap_rows % SUBLANE
    if M <= cap_rows:
        tm = M                      # whole array in one block (small inputs)
    else:
        tm = cap_rows
        while tm >= SUBLANE and M % tm:
            tm -= SUBLANE           # largest multiple-of-8 divisor <= cap
        if tm < SUBLANE:
            tm = cap_rows           # no divisor: masked last tile via cdiv grid
    grid = (pl.cdiv(M, tm),)
    return pl.pallas_call(
        _copy_kernel,
        out_shape=jax.ShapeDtypeStruct((M, N), x2d.dtype),
        grid=grid,
        in_specs=[pl.BlockSpec((tm, N), lambda i: (i, 0))],
        out_specs=pl.BlockSpec((tm, N), lambda i: (i, 0)),
        compiler_params=pltpu.CompilerParams(
            dimension_semantics=("parallel",),
            vmem_limit_bytes=budget),
        cost_estimate=pl.CostEstimate(
            flops=0, transcendentals=0,
            bytes_accessed=2 * M * N * itemsize),
    )(x2d)


def pallas_identity(x):
    """Forward of nn.Identity: returns a value equal to x (Pallas copy)."""
    orig_shape = x.shape
    flat = x.reshape(-1)
    L = flat.shape[0]
    if L == 0:
        return x
    if L % LANE == 0:
        # Lane-dense view: widest power-of-two multiple of 128 lanes that
        # divides L while keeping at least 8 rows (capped so one row stays
        # small); gives unmasked full-lane stores and (8,128)-aligned tiles.
        n = LANE
        while L % (2 * n) == 0 and 2 * n <= 4096 and L // (2 * n) >= SUBLANE:
            n *= 2
        out2d = _tiled_copy_2d(flat.reshape(L // n, n))
        return out2d.reshape(orig_shape)
    # TODO(synk): element counts that are not a multiple of 128 take a
    # pad + slice HBM round trip here; a masked-store kernel would avoid it.
    pad = (-L) % (SUBLANE * LANE)
    flat_p = jnp.pad(flat, (0, pad))
    out2d = _tiled_copy_2d(flat_p.reshape(-1, LANE))
    return out2d.reshape(-1)[:L].reshape(orig_shape)


if __name__ == "__main__":
    key = jax.random.PRNGKey(0)
    # Small, module-consistent example input: (batch, channels, H, W).
    x = jax.random.normal(key, (2, 4, 16, 16), jnp.float32)

    fwd = jax.jit(pallas_identity)
    out = jax.block_until_ready(fwd(x))

    assert out.shape == x.shape
    assert out.dtype == x.dtype
    assert bool(jnp.array_equal(out, x))
    print("KERNEL_OK")
</pallas_src>

<mosaic_0001>
module attributes {stable_mosaic.version = 11 : i64} {
  func.func @_copy_kernel(%arg0: i32, %arg1: memref<8x256xf32, #tpu.memory_space<vmem>>, %arg2: memref<8x256xf32, #tpu.memory_space<vmem>>) attributes {dimension_semantics = [#tpu.dimension_semantics<parallel>], iteration_bounds = array<i64: 1>, scalar_prefetch = 0 : i64, scratch_operands = 0 : i64, tpu.core_type = #tpu.core_type<tc>, window_params = [{transform_indices = @transform_0, window_bounds = array<i64: 8, 256>}, {transform_indices = @transform_1, window_bounds = array<i64: 8, 256>}]} {
    %c0 = arith.constant 0 : index
    %c0_0 = arith.constant 0 : index
    %0 = vector.load %arg1[%c0, %c0_0] : memref<8x256xf32, #tpu.memory_space<vmem>>, vector<8x256xf32>
    %c0_1 = arith.constant 0 : index
    %c0_2 = arith.constant 0 : index
    %1 = vector.load %arg2[%c0_1, %c0_2] : memref<8x256xf32, #tpu.memory_space<vmem>>, vector<8x256xf32>
    tpu.vector_store %arg2[%c0_1, %c0_2], %0 {strides = array<i32>} : memref<8x256xf32, #tpu.memory_space<vmem>>, vector<8x256xf32>,
    return
  }
  func.func @transform_0(%arg0: i32) -> (i32, i32) {
    %c0_i32 = arith.constant 0 : i32
    %c0_i32_0 = arith.constant 0 : i32
    return %arg0, %c0_i32 : i32, i32
  }
  func.func @transform_1(%arg0: i32) -> (i32, i32) {
    %c0_i32 = arith.constant 0 : i32
    %c0_i32_0 = arith.constant 0 : i32
    return %arg0, %c0_i32 : i32, i32
  }
}

</mosaic_0001>

<llo_original>
// kernel: pallas_identity.1
$region0: #{pallas_identity.1}
  #allocation0 [shape = 'u32[]', space=smem, size = 0x4, offset = 0x4, fixed_abs, tag = 'smem constant byte address 0x4 - core index']
  #allocation1 [shape = 'u32[144,128]{1,0:T(1,128)}', space=vmem, size = 0x12000, scoped, tag = 'internal scratch']
  %s0 = inlined_call_operand.vmem [shape: f32[8,256], index: 0, kind: input, shape index: {}]
  %s1 = inlined_call_operand.vmem [shape: f32[8,256], index: 1, kind: output, shape index: {}]
  %s2 = sld [smem:[#allocation0]]
  $region14: #{pallas_identity.1} parent=0
    _
  %s4 = ssub.s32 1, %s2
  %s5 = scalar_select 0, %s4, %s2
  // Predicated region
  $region2: #{pallas_identity.1} parent=0 // pred_check
    _
  $region3: #{pallas_identity.1} parent=0 // pred_check_branch
    %7 = sbr.rel (0) target = $region5
  $region4: #{pallas_identity.1} parent=0 // pred_region
    _
  $region5: #{pallas_identity.1} parent=0 // pred_fallthru
    _
  %v8 = vld [vmem:[%s0] sm:$0xff]
  %v9 = vld [vmem:[%s0 + $0x8] sm:$0xff]
  %10 = vst [vmem:[%s1] sm:$0xff] %v8
  %11 = vst [vmem:[%s1 + $0x8] sm:$0xff] %v9
  // Predicated region
  $region6: #{pallas_identity.1} parent=0 // pred_check
    _
  $region7: #{pallas_identity.1} parent=0 // pred_check_branch
    %13 = sbr.rel (0) target = $region9
  $region8: #{pallas_identity.1} parent=0 // pred_region
    _
  $region9: #{pallas_identity.1} parent=0 // pred_fallthru
    _
  // Predicated region
  $region10: #{pallas_identity.1} parent=0 // pred_check
    _
  $region11: #{pallas_identity.1} parent=0 // pred_check_branch
    %15 = sbr.rel (0) target = $region13
  $region12: #{pallas_identity.1} parent=0 // pred_region
    _
  $region13: #{pallas_identity.1} parent=0 // pred_fallthru
    _

</llo_original>
